<compile_context>
chip_gen: v7x
topology: tpu7x:2x2x1
jax: 0.10.0
libtpu: 0.0.40
codegen_flags: <defaults>
</compile_context>

<pallas_src>
import jax
import jax.numpy as jnp
from jax import lax
from jax.experimental import pallas as pl
from jax.experimental.pallas import tpu as pltpu

_LANE = 128
_SUBLANE = 8
_HEAD_WIDTH = 128      # fused, lane-dense head / output slab width
_ACTOR_COL = 1         # cols [1, 1+A): actor logits          (col 0: value)
_LOGP_COL = 8          # cols [8, 8+A): log-softmax(actor)
_ENT_COL = 16          # col 16: per-row sum(probs * logp) == -entropy/row
_MAX_BLOCK_ROWS = 512  # batch tile (rows) upper bound


def _round_up(v, m):
    return (v + m - 1) // m * m


def _mish_f32(x):
    # mish(x) = x * tanh(softplus(x)) = x * (y^2 - 1) / (y^2 + 1), y = 1 + exp(x).
    # exp is clamped (mish(x) -> x for large x) so y^2 stays finite in f32.
    y = 1.0 + jnp.exp(jnp.minimum(x, 20.0))
    y2 = y * y
    return x * (y2 - 1.0) * pl.reciprocal(y2 + 1.0, approx=True)


def acnet_fused_kernel(x_ref, w1_ref, b1_ref, w2_ref, b2_ref, wh_ref, out_ref,
                       *, num_actions):
    """Fused actor-critic forward.

    2 mish MLP layers (bf16 MXU operands, f32 accumulation) -> one lane-dense
    [H, 128] head matmul in f32 (value + actor logits, actor logits duplicated
    into the logp columns) -> masked softmax / log-softmax over the actor
    columns -> per-row entropy partial packed into a spare lane.  One unmasked
    128-lane f32 store per block.
    """
    blk_b = out_ref.shape[0]

    # ---- MLP trunk ---------------------------------------------------------
    x = x_ref[...].astype(jnp.bfloat16)
    h1 = jnp.dot(x, w1_ref[...], preferred_element_type=jnp.float32) + b1_ref[...]
    h1 = _mish_f32(h1).astype(jnp.bfloat16)

    h2 = jnp.dot(h1, w2_ref[...], preferred_element_type=jnp.float32) + b2_ref[...]
    h2 = _mish_f32(h2)                       # stays f32 for the head matmul

    # ---- fused head (f32, K = hidden = 128 -> cheap) -----------------------
    hy = jnp.dot(h2, wh_ref[...], preferred_element_type=jnp.float32)  # [blk_b,128]

    # ---- softmax / log-softmax over the actor columns ----------------------
    col = lax.broadcasted_iota(jnp.int32, (blk_b, _HEAD_WIDTH), 1)
    amask = (col >= _ACTOR_COL) & (col < _ACTOR_COL + num_actions)
    lmask = (col >= _LOGP_COL) & (col < _LOGP_COL + num_actions)

    z = jnp.where(amask, hy, jnp.float32(-1e30))
    m = jnp.max(z, axis=1, keepdims=True)
    e = jnp.exp(z - m)                                   # exactly 0 off-mask
    s = jnp.sum(e, axis=1, keepdims=True)
    inv_s = pl.reciprocal(s, approx=True)
    log_s = jnp.log(s)
    probs = e * inv_s                                    # in-vreg only

    logit_minus = hy - (m + log_s)                       # logp wherever hy is a logit
    plogp = jnp.sum(probs * jnp.where(amask, logit_minus, 0.0),
                    axis=1, keepdims=True)               # [blk_b, 1]

    # ---- pack everything into one lane-dense slab; single unmasked store ---
    packed = jnp.where(lmask, logit_minus, hy)           # logp at cols 8..8+A
    packed = jnp.where(col == _ENT_COL, plogp, packed)   # entropy partial at col 16
    out_ref[...] = packed


class ACNetPallas:
    """Deterministically initialized synthetic actor-critic net (Pallas hot path)."""

    def __init__(self, in_features, hidden=128, num_actions=4, seed=0):
        assert hidden % _LANE == 0, "hidden must be a multiple of 128"
        assert _ACTOR_COL + num_actions <= _LOGP_COL, "num_actions must be <= 7"
        assert _LOGP_COL + num_actions <= _ENT_COL
        self.in_features = in_features
        self.hidden = hidden
        self.num_actions = num_actions

        keys = jax.random.split(jax.random.PRNGKey(seed), 4)

        def init(key, shape, fan_in):
            return jax.random.normal(key, shape, jnp.float32) / jnp.sqrt(fan_in)

        # Trunk weights live in bf16 (MXU operands); biases in f32.
        self.w1 = init(keys[0], (in_features, hidden), in_features).astype(jnp.bfloat16)
        self.b1 = jnp.zeros((1, hidden), jnp.float32)
        self.w2 = init(keys[1], (hidden, hidden), hidden).astype(jnp.bfloat16)
        self.b2 = jnp.zeros((1, hidden), jnp.float32)

        # Fused, lane-dense head (f32): col 0 = value, cols 1..1+A = actor,
        # cols 8..8+A = actor duplicated (so logp can be computed in-place).
        wv = init(keys[2], (hidden, 1), hidden)
        wa = init(keys[3], (hidden, num_actions), hidden)
        self.wh = (jnp.zeros((hidden, _HEAD_WIDTH), jnp.float32)
                   .at[:, 0:1].set(wv)
                   .at[:, _ACTOR_COL:_ACTOR_COL + num_actions].set(wa)
                   .at[:, _LOGP_COL:_LOGP_COL + num_actions].set(wa))
        # TODO(synk): a real checkpoint's head biases would be folded into wh/bh;
        #             the synthetic head bias is structurally zero so it is dropped.

    # ---- fused forward + heads: ONE pallas_call, ONE output slab -----------
    def _fused(self, x_nchw):
        B = x_nchw.shape[0]
        x = x_nchw.reshape(B, -1)                     # == torch .view(B, -1)
        assert x.shape[1] == self.in_features

        # Batch tiling: pad only to a sublane multiple / tile multiple; up to
        # 512-row tiles, but keep nb >= 2 when a second block is warranted so
        # the "parallel" axis can shard across both TensorCores on v7x.
        b_min = max(_SUBLANE, _round_up(B, _SUBLANE))
        if b_min <= _MAX_BLOCK_ROWS:
            blk_b = b_min
        else:
            blk_b = min(_MAX_BLOCK_ROWS,
                        _round_up(pl.cdiv(b_min, 2), _SUBLANE))
        b_pad = _round_up(b_min, blk_b)
        nb = b_pad // blk_b

        if b_pad != B:
            x = jnp.pad(x, ((0, b_pad - B), (0, 0)))  # only for ragged batches

        out = pl.pallas_call(
            lambda *refs: acnet_fused_kernel(*refs, num_actions=self.num_actions),
            grid=(nb,),
            in_specs=[
                pl.BlockSpec((blk_b, self.in_features), lambda i: (i, 0)),
                pl.BlockSpec((self.in_features, self.hidden), lambda i: (0, 0)),
                pl.BlockSpec((1, self.hidden), lambda i: (0, 0)),
                pl.BlockSpec((self.hidden, self.hidden), lambda i: (0, 0)),
                pl.BlockSpec((1, self.hidden), lambda i: (0, 0)),
                pl.BlockSpec((self.hidden, _HEAD_WIDTH), lambda i: (0, 0)),
            ],
            out_specs=pl.BlockSpec((blk_b, _HEAD_WIDTH), lambda i: (i, 0)),
            out_shape=jax.ShapeDtypeStruct((b_pad, _HEAD_WIDTH), jnp.float32),
            compiler_params=pltpu.CompilerParams(
                dimension_semantics=("parallel",)),
        )(x, self.w1, self.b1, self.w2, self.b2, self.wh)

        A = self.num_actions
        value = out[:B, 0:1]
        actor = out[:B, _ACTOR_COL:_ACTOR_COL + A]
        logp = out[:B, _LOGP_COL:_LOGP_COL + A]
        entropy = -jnp.mean(out[:B, _ENT_COL])        # padded rows sliced away
        return value, actor, logp, entropy

    # ---- PyTorch-API-equivalent surface -------------------------------------
    def forward(self, x):
        value, actor, _, _ = self._fused(x)
        return value, actor

    __call__ = forward

    def act(self, x, key):
        # sample directly from the kernel-computed log-softmax (no re-log)
        _, _, logp, _ = self._fused(x)
        return jax.random.categorical(key, logp, axis=1)[:, None]

    def deterministic_act(self, x):
        _, actor, _, _ = self._fused(x)
        return jnp.argmax(actor, axis=1)

    def get_value(self, x):
        value, _, _, _ = self._fused(x)
        return value

    def evaluate_actions(self, x, actions):
        value, _, logp, entropy = self._fused(x)
        action_log_probs = jnp.take_along_axis(logp, actions, axis=1)
        return value, action_log_probs, entropy


if __name__ == "__main__":
    B, C, H, W = 2, 4, 16, 16
    key = jax.random.PRNGKey(0)
    kx, ka, ks = jax.random.split(key, 3)

    x = jax.random.normal(kx, (B, C, H, W), jnp.float32)    # NCHW
    net = ACNetPallas(in_features=C * H * W, hidden=128, num_actions=4, seed=0)

    value, actor = net(x)
    jax.block_until_ready((value, actor))
    assert value.shape == (B, 1) and actor.shape == (B, 4)
    assert bool(jnp.all(jnp.isfinite(value))) and bool(jnp.all(jnp.isfinite(actor)))

    actions = jax.random.randint(ka, (B, 1), 0, 4)
    v, alp, ent = net.evaluate_actions(x, actions)
    jax.block_until_ready((v, alp, ent))
    assert v.shape == (B, 1) and alp.shape == (B, 1)
    assert bool(jnp.isfinite(ent))

    # log-softmax sanity: exp(logp) rows sum to ~1 over the action columns.
    _, _, logp_full, _ = net._fused(x)
    row_sums = jnp.sum(jnp.exp(logp_full), axis=1)
    assert bool(jnp.all(jnp.abs(row_sums - 1.0) < 1e-2))

    sampled = net.act(x, ks)
    det = net.deterministic_act(x)
    jax.block_until_ready((sampled, det))
    assert sampled.shape == (B, 1) and det.shape == (B,)

    print("KERNEL_OK")
</pallas_src>

<mosaic_0001>
module attributes {stable_mosaic.version = 11 : i64} {
  func.func @_lambda_(%arg0: i32, %arg1: memref<8x1024xf32, #tpu.memory_space<vmem>>, %arg2: memref<1024x128xbf16, #tpu.memory_space<vmem>>, %arg3: memref<1x128xf32, #tpu.memory_space<vmem>>, %arg4: memref<128x128xbf16, #tpu.memory_space<vmem>>, %arg5: memref<1x128xf32, #tpu.memory_space<vmem>>, %arg6: memref<128x128xf32, #tpu.memory_space<vmem>>, %arg7: memref<8x128xf32, #tpu.memory_space<vmem>>) attributes {dimension_semantics = [#tpu.dimension_semantics<parallel>], iteration_bounds = array<i64: 1>, scalar_prefetch = 0 : i64, scratch_operands = 0 : i64, tpu.core_type = #tpu.core_type<tc>, window_params = [{transform_indices = @transform_0, window_bounds = array<i64: 8, 1024>}, {pipeline_mode = #tpu.pipeline_mode<synchronous>, transform_indices = @transform_1, window_bounds = array<i64: 1024, 128>}, {pipeline_mode = #tpu.pipeline_mode<synchronous>, transform_indices = @transform_2, window_bounds = array<i64: 1, 128>}, {pipeline_mode = #tpu.pipeline_mode<synchronous>, transform_indices = @transform_3, window_bounds = array<i64: 128, 128>}, {pipeline_mode = #tpu.pipeline_mode<synchronous>, transform_indices = @transform_4, window_bounds = array<i64: 1, 128>}, {pipeline_mode = #tpu.pipeline_mode<synchronous>, transform_indices = @transform_5, window_bounds = array<i64: 128, 128>}, {transform_indices = @transform_6, window_bounds = array<i64: 8, 128>}]} {
    %c0 = arith.constant 0 : index
    %c0_0 = arith.constant 0 : index
    %0 = vector.load %arg1[%c0, %c0_0] : memref<8x1024xf32, #tpu.memory_space<vmem>>, vector<8x1024xf32>
    %1 = arith.truncf %0 : vector<8x1024xf32> to vector<8x1024xbf16>
    %c0_1 = arith.constant 0 : index
    %c0_2 = arith.constant 0 : index
    %2 = vector.load %arg2[%c0_1, %c0_2] : memref<1024x128xbf16, #tpu.memory_space<vmem>>, vector<1024x128xbf16>
    %cst = arith.constant dense<0.000000e+00> : vector<8x128xf32>
    %3 = tpu.matmul %1, %2, %cst {dimension_numbers = #tpu.dot_dimension_numbers<[1], [0], [0], [1], [0, 0, 1, 1], [], []>} : vector<8x1024xbf16>, vector<1024x128xbf16>, vector<8x128xf32> -> vector<8x128xf32>
    %c0_3 = arith.constant 0 : index
    %c0_4 = arith.constant 0 : index
    %4 = vector.load %arg3[%c0_3, %c0_4] : memref<1x128xf32, #tpu.memory_space<vmem>>, vector<1x128xf32>
    %5 = vector.broadcast %4 : vector<1x128xf32> to vector<8x128xf32>
    %6 = arith.addf %3, %5 : vector<8x128xf32>
    %cst_5 = arith.constant 2.000000e+01 : f32
    %7 = vector.broadcast %cst_5 : f32 to vector<8x128xf32>
    %8 = arith.minimumf %6, %7 : vector<8x128xf32>
    %9 = math.exp %8 : vector<8x128xf32>
    %cst_6 = arith.constant 1.000000e+00 : f32
    %10 = vector.broadcast %cst_6 : f32 to vector<8x128xf32>
    %11 = arith.addf %10, %9 : vector<8x128xf32>
    %12 = arith.mulf %11, %11 : vector<8x128xf32>
    %cst_7 = arith.constant 1.000000e+00 : f32
    %13 = vector.broadcast %cst_7 : f32 to vector<8x128xf32>
    %14 = arith.subf %12, %13 : vector<8x128xf32>
    %15 = arith.mulf %6, %14 : vector<8x128xf32>
    %cst_8 = arith.constant 1.000000e+00 : f32
    %16 = vector.broadcast %cst_8 : f32 to vector<8x128xf32>
    %17 = arith.addf %12, %16 : vector<8x128xf32>
    %18 = tpu.reciprocal %17 {approx = true} : vector<8x128xf32> -> vector<8x128xf32>
    %19 = arith.mulf %15, %18 : vector<8x128xf32>
    %20 = arith.truncf %19 : vector<8x128xf32> to vector<8x128xbf16>
    %c0_9 = arith.constant 0 : index
    %c0_10 = arith.constant 0 : index
    %21 = vector.load %arg4[%c0_9, %c0_10] : memref<128x128xbf16, #tpu.memory_space<vmem>>, vector<128x128xbf16>
    %cst_11 = arith.constant dense<0.000000e+00> : vector<8x128xf32>
    %22 = tpu.matmul %20, %21, %cst_11 {dimension_numbers = #tpu.dot_dimension_numbers<[1], [0], [0], [1], [0, 0, 1, 1], [], []>} : vector<8x128xbf16>, vector<128x128xbf16>, vector<8x128xf32> -> vector<8x128xf32>
    %c0_12 = arith.constant 0 : index
    %c0_13 = arith.constant 0 : index
    %23 = vector.load %arg5[%c0_12, %c0_13] : memref<1x128xf32, #tpu.memory_space<vmem>>, vector<1x128xf32>
    %24 = vector.broadcast %23 : vector<1x128xf32> to vector<8x128xf32>
    %25 = arith.addf %22, %24 : vector<8x128xf32>
    %cst_14 = arith.constant 2.000000e+01 : f32
    %26 = vector.broadcast %cst_14 : f32 to vector<8x128xf32>
    %27 = arith.minimumf %25, %26 : vector<8x128xf32>
    %28 = math.exp %27 : vector<8x128xf32>
    %cst_15 = arith.constant 1.000000e+00 : f32
    %29 = vector.broadcast %cst_15 : f32 to vector<8x128xf32>
    %30 = arith.addf %29, %28 : vector<8x128xf32>
    %31 = arith.mulf %30, %30 : vector<8x128xf32>
    %cst_16 = arith.constant 1.000000e+00 : f32
    %32 = vector.broadcast %cst_16 : f32 to vector<8x128xf32>
    %33 = arith.subf %31, %32 : vector<8x128xf32>
    %34 = arith.mulf %25, %33 : vector<8x128xf32>
    %cst_17 = arith.constant 1.000000e+00 : f32
    %35 = vector.broadcast %cst_17 : f32 to vector<8x128xf32>
    %36 = arith.addf %31, %35 : vector<8x128xf32>
    %37 = tpu.reciprocal %36 {approx = true} : vector<8x128xf32> -> vector<8x128xf32>
    %38 = arith.mulf %34, %37 : vector<8x128xf32>
    %c0_18 = arith.constant 0 : index
    %c0_19 = arith.constant 0 : index
    %39 = vector.load %arg6[%c0_18, %c0_19] : memref<128x128xf32, #tpu.memory_space<vmem>>, vector<128x128xf32>
    %cst_20 = arith.constant dense<0.000000e+00> : vector<8x128xf32>
    %40 = tpu.matmul %38, %39, %cst_20 {dimension_numbers = #tpu.dot_dimension_numbers<[1], [0], [0], [1], [0, 0, 1, 1], [], []>} : vector<8x128xf32>, vector<128x128xf32>, vector<8x128xf32> -> vector<8x128xf32>
    %41 = tpu.iota {dimensions = array<i32: 1>} : vector<8x128xi32>
    %c1_i32 = arith.constant 1 : i32
    %42 = vector.broadcast %c1_i32 : i32 to vector<8x128xi32>
    %43 = arith.cmpi sge, %41, %42 : vector<8x128xi32>
    %c5_i32 = arith.constant 5 : i32
    %44 = vector.broadcast %c5_i32 : i32 to vector<8x128xi32>
    %45 = arith.cmpi slt, %41, %44 : vector<8x128xi32>
    %46 = arith.andi %43, %45 : vector<8x128xi1>
    %c8_i32 = arith.constant 8 : i32
    %47 = vector.broadcast %c8_i32 : i32 to vector<8x128xi32>
    %48 = arith.cmpi sge, %41, %47 : vector<8x128xi32>
    %c12_i32 = arith.constant 12 : i32
    %49 = vector.broadcast %c12_i32 : i32 to vector<8x128xi32>
    %50 = arith.cmpi slt, %41, %49 : vector<8x128xi32>
    %51 = arith.andi %48, %50 : vector<8x128xi1>
    %cst_21 = arith.constant -1.000000e+30 : f32
    %52 = vector.broadcast %cst_21 : f32 to vector<8x128xf32>
    %53 = arith.select %46, %40, %52 : vector<8x128xi1>, vector<8x128xf32>
    %cst_22 = arith.constant dense<0xFF800000> : vector<8xf32>
    %54 = vector.multi_reduction <maximumf>, %53, %cst_22 [1] : vector<8x128xf32> to vector<8xf32>
    %55 = vector.shape_cast %54 : vector<8xf32> to vector<8x1xf32>
    %56 = vector.broadcast %55 : vector<8x1xf32> to vector<8x128xf32>
    %57 = arith.subf %53, %56 : vector<8x128xf32>
    %58 = math.exp %57 : vector<8x128xf32>
    %cst_23 = arith.constant dense<0.000000e+00> : vector<8xf32>
    %59 = vector.multi_reduction <add>, %58, %cst_23 [1] : vector<8x128xf32> to vector<8xf32>
    %60 = vector.shape_cast %59 : vector<8xf32> to vector<8x1xf32>
    %61 = tpu.reciprocal %60 {approx = true} : vector<8x1xf32> -> vector<8x1xf32>
    %62 = math.log %60 : vector<8x1xf32>
    %63 = vector.broadcast %61 : vector<8x1xf32> to vector<8x128xf32>
    %64 = arith.mulf %58, %63 : vector<8x128xf32>
    %65 = arith.addf %55, %62 : vector<8x1xf32>
    %66 = vector.broadcast %65 : vector<8x1xf32> to vector<8x128xf32>
    %67 = arith.subf %40, %66 : vector<8x128xf32>
    %cst_24 = arith.constant 0.000000e+00 : f32
    %68 = vector.broadcast %cst_24 : f32 to vector<8x128xf32>
    %69 = arith.select %46, %67, %68 : vector<8x128xi1>, vector<8x128xf32>
    %70 = arith.mulf %64, %69 : vector<8x128xf32>
    %cst_25 = arith.constant dense<0.000000e+00> : vector<8xf32>
    %71 = vector.multi_reduction <add>, %70, %cst_25 [1] : vector<8x128xf32> to vector<8xf32>
    %72 = vector.shape_cast %71 : vector<8xf32> to vector<8x1xf32>
    %73 = arith.select %51, %67, %40 : vector<8x128xi1>, vector<8x128xf32>
    %c16_i32 = arith.constant 16 : i32
    %74 = vector.broadcast %c16_i32 : i32 to vector<8x128xi32>
    %75 = arith.cmpi eq, %41, %74 : vector<8x128xi32>
    %76 = vector.shape_cast %72 : vector<8x1xf32> to vector<8x1xf32>
    %77 = vector.broadcast %76 : vector<8x1xf32> to vector<8x128xf32>
    %78 = arith.select %75, %77, %73 : vector<8x128xi1>, vector<8x128xf32>
    %c0_26 = arith.constant 0 : index
    %c0_27 = arith.constant 0 : index
    %79 = vector.load %arg7[%c0_26, %c0_27] : memref<8x128xf32, #tpu.memory_space<vmem>>, vector<8x128xf32>
    tpu.vector_store %arg7[%c0_26, %c0_27], %78 {strides = array<i32>} : memref<8x128xf32, #tpu.memory_space<vmem>>, vector<8x128xf32>,
    return
  }
  func.func @transform_0(%arg0: i32) -> (i32, i32) {
    %c0_i32 = arith.constant 0 : i32
    %c0_i32_0 = arith.constant 0 : i32
    return %arg0, %c0_i32 : i32, i32
  }
  func.func @transform_1(%arg0: i32) -> (i32, i32) {
    %c0_i32 = arith.constant 0 : i32
    %c0_i32_0 = arith.constant 0 : i32
    %c0_i32_1 = arith.constant 0 : i32
    return %c0_i32, %c0_i32_0 : i32, i32
  }
  func.func @transform_2(%arg0: i32) -> (i32, i32) {
    %c0_i32 = arith.constant 0 : i32
    %c0_i32_0 = arith.constant 0 : i32
    %c0_i32_1 = arith.constant 0 : i32
    return %c0_i32, %c0_i32_0 : i32, i32
  }
  func.func @transform_3(%arg0: i32) -> (i32, i32) {
    %c0_i32 = arith.constant 0 : i32
    %c0_i32_0 = arith.constant 0 : i32
    %c0_i32_1 = arith.constant 0 : i32
    return %c0_i32, %c0_i32_0 : i32, i32
  }
  func.func @transform_4(%arg0: i32) -> (i32, i32) {
    %c0_i32 = arith.constant 0 : i32
    %c0_i32_0 = arith.constant 0 : i32
    %c0_i32_1 = arith.constant 0 : i32
    return %c0_i32, %c0_i32_0 : i32, i32
  }
  func.func @transform_5(%arg0: i32) -> (i32, i32) {
    %c0_i32 = arith.constant 0 : i32
    %c0_i32_0 = arith.constant 0 : i32
    %c0_i32_1 = arith.constant 0 : i32
    return %c0_i32, %c0_i32_0 : i32, i32
  }
  func.func @transform_6(%arg0: i32) -> (i32, i32) {
    %c0_i32 = arith.constant 0 : i32
    %c0_i32_0 = arith.constant 0 : i32
    return %arg0, %c0_i32 : i32, i32
  }
}

</mosaic_0001>

<llo_original>
// kernel: tpu_custom_call.1
$region0: #{tpu_custom_call.1}
  #allocation0 [shape = 'u32[]', space=smem, size = 0x4, offset = 0x4, fixed_abs, tag = 'smem constant byte address 0x4 - core index']
  #allocation1 [shape = 'u32[144,128]{1,0:T(1,128)}', space=vmem, size = 0x12000, scoped, tag = 'internal scratch']
  %s0 = inlined_call_operand.hbm [shape: f32[8,1024], index: 0, kind: input, shape index: {}]
  %s1 = inlined_call_operand.hbm [shape: bf16[1024,128], index: 1, kind: input, shape index: {}]
  %s2 = inlined_call_operand.vmem [shape: f32[1,128], index: 2, kind: input, shape index: {}]
  %s3 = inlined_call_operand.hbm [shape: bf16[128,128], index: 3, kind: input, shape index: {}]
  %s4 = inlined_call_operand.vmem [shape: f32[1,128], index: 4, kind: input, shape index: {}]
  %s5 = inlined_call_operand.hbm [shape: f32[128,128], index: 5, kind: input, shape index: {}]
  %s6 = inlined_call_operand.hbm [shape: f32[8,128], index: 6, kind: output, shape index: {}]
  %s7 = sld [smem:[#allocation0]]
  $region50: #{tpu_custom_call.1} parent=0
    _
  %s9 = ssub.s32 1, %s7
  %s10 = scalar_select 0, %s9, %s7
  $region1: #{tpu_custom_call.1} parent=0
    #allocation2 [shape = 'u8[32768]{0}', space=vmem, size = 0x8000, scoped, tag = 'input window, operand 0, single buffered']
    #allocation3 [shape = 's32[1]{0}', space=sflag, size = 0x4, scoped, tag = 'scoped memory for tpu_custom_call.1']
    #allocation4 [shape = 's32[1]{0}', space=sflag, size = 0x4, scoped, tag = 'scoped memory for tpu_custom_call.1']
    #allocation5 [shape = 'u8[262144]{0}', space=vmem, size = 0x40000, scoped, tag = 'input window, operand 1, single buffered']
    #allocation6 [shape = 's32[1]{0}', space=sflag, size = 0x4, scoped, tag = 'scoped memory for tpu_custom_call.1']
    #allocation7 [shape = 'u8[32768]{0}', space=vmem, size = 0x8000, scoped, tag = 'input window, operand 3, single buffered']
    #allocation8 [shape = 'u8[65536]{0}', space=vmem, size = 0x10000, scoped, tag = 'input window, operand 5, single buffered']
    #allocation9 [shape = 's32[1]{0}', space=sflag, size = 0x4, scoped, tag = 'scoped memory for tpu_custom_call.1']
    #allocation10 [shape = 'u8[4096]{0}', space=vmem, size = 0x1000, scoped, tag = 'output window, operand 0, single buffered']
    %11 = vsyncpa [#allocation3], 0
    %12 = vsyncpa [#allocation6], 0
    %13 = vsyncpa [#allocation9], 0
    %14 = vsyncpa [#allocation4], 0
    // Predicated region
    $region2: #{tpu_custom_call.1} parent=1 // pred_check
      _
    $region3: #{tpu_custom_call.1} parent=1 // pred_check_branch
      %16 = sbr.rel (0) target = $region5
    $region4: #{tpu_custom_call.1} parent=1 // pred_region
      %s18 = ssub.s32 1024, 1024
      %19 = vsyncadd [#allocation3], %s18
      %s21 = sshll.u32 [#allocation2], 4
      %s22 = int_to_ptr.vmem [resolvable:$true] %s21
      %24 = dma.hbm_to_vmem [thread:$0]  %s0, 1024, %s22, [#allocation3]
    $region5: #{tpu_custom_call.1} parent=1 // pred_fallthru
      _
    // Predicated region
    $region6: #{tpu_custom_call.1} parent=1 // pred_check
      _
    $region7: #{tpu_custom_call.1} parent=1 // pred_check_branch
      %26 = sbr.rel (0) target = $region9
    $region8: #{tpu_custom_call.1} parent=1 // pred_region
      %s28 = ssub.s32 8192, 8192
      %29 = vsyncadd [#allocation6], %s28
      %s30 = sshll.u32 [#allocation5], 4
      %s31 = int_to_ptr.vmem [resolvable:$true] %s30
      %36 = dma.hbm_to_vmem [thread:$0]  %s1, 8192, %s31, [#allocation6], 64, 64, 4
    $region9: #{tpu_custom_call.1} parent=1 // pred_fallthru
      _
    // Predicated region
    $region10: #{tpu_custom_call.1} parent=1 // pred_check
      _
    $region11: #{tpu_custom_call.1} parent=1 // pred_check_branch
      %38 = sbr.rel (0) target = $region13
    $region12: #{tpu_custom_call.1} parent=1 // pred_region
      _
    $region13: #{tpu_custom_call.1} parent=1 // pred_fallthru
      _
    // Predicated region
    $region14: #{tpu_custom_call.1} parent=1 // pred_check
      _
    $region15: #{tpu_custom_call.1} parent=1 // pred_check_branch
      %40 = sbr.rel (0) target = $region17
    $region16: #{tpu_custom_call.1} parent=1 // pred_region
      %s42 = ssub.s32 1024, 1024
      %43 = vsyncadd [#allocation6], %s42
      %s44 = sshll.u32 [#allocation7], 4
      %s45 = int_to_ptr.vmem [resolvable:$true] %s44
      %50 = dma.hbm_to_vmem [thread:$0]  %s3, 1024, %s45, [#allocation6], 64, 64, 4
    $region17: #{tpu_custom_call.1} parent=1 // pred_fallthru
      _
    // Predicated region
    $region18: #{tpu_custom_call.1} parent=1 // pred_check
      _
    $region19: #{tpu_custom_call.1} parent=1 // pred_check_branch
      %52 = sbr.rel (0) target = $region21
    $region20: #{tpu_custom_call.1} parent=1 // pred_region
      _
    $region21: #{tpu_custom_call.1} parent=1 // pred_fallthru
      _
    // Predicated region
    $region22: #{tpu_custom_call.1} parent=1 // pred_check
      _
    $region23: #{tpu_custom_call.1} parent=1 // pred_check_branch
      %54 = sbr.rel (0) target = $region25
    $region24: #{tpu_custom_call.1} parent=1 // pred_region
      %s56 = ssub.s32 2048, 2048
      %57 = vsyncadd [#allocation9], %s56
      %s58 = sshll.u32 [#allocation8], 4
      %s59 = int_to_ptr.vmem [resolvable:$true] %s58
      %64 = dma.hbm_to_vmem [thread:$0]  %s5, 2048, %s59, [#allocation9], 128, 128, 8
    $region25: #{tpu_custom_call.1} parent=1 // pred_fallthru
      _
    // Predicated region
    $region26: #{tpu_custom_call.1} parent=1 // pred_check
      _
    $region27: #{tpu_custom_call.1} parent=1 // pred_check_branch
      %66 = sbr.rel (0) target = $region29
    $region28: #{tpu_custom_call.1} parent=1 // pred_region
      %67 = dma.done [#allocation3], 1024
    $region29: #{tpu_custom_call.1} parent=1 // pred_fallthru
      _
    // Predicated region
    $region30: #{tpu_custom_call.1} parent=1 // pred_check
      _
    $region31: #{tpu_custom_call.1} parent=1 // pred_check_branch
      %69 = sbr.rel (0) target = $region33
    $region32: #{tpu_custom_call.1} parent=1 // pred_region
      %70 = dma.done [#allocation6], 8192
    $region33: #{tpu_custom_call.1} parent=1 // pred_fallthru
      _
    // Predicated region
    $region34: #{tpu_custom_call.1} parent=1 // pred_check
      _
    $region35: #{tpu_custom_call.1} parent=1 // pred_check_branch
      %72 = sbr.rel (0) target = $region37
    $region36: #{tpu_custom_call.1} parent=1 // pred_region
      %73 = dma.done [#allocation6], 1024
    $region37: #{tpu_custom_call.1} parent=1 // pred_fallthru
      _
    // Predicated region
    $region38: #{tpu_custom_call.1} parent=1 // pred_check
      _
    $region39: #{tpu_custom_call.1} parent=1 // pred_check_branch
      %75 = sbr.rel (0) target = $region41
    $region40: #{tpu_custom_call.1} parent=1 // pred_region
      %76 = dma.done [#allocation9], 2048
    $region41: #{tpu_custom_call.1} parent=1 // pred_fallthru
      _
    %v78 = vld [vmem:[#allocation2] sm:$0xff]
    %v79 = vld [vmem:[#allocation2 + $0x8] sm:$0xff]
    %v80 = vld [vmem:[#allocation2 + $0x10] sm:$0xff]
    %v81 = vld [vmem:[#allocation2 + $0x18] sm:$0xff]
    %v82 = vld [vmem:[#allocation2 + $0x20] sm:$0xff]
    %v83 = vld [vmem:[#allocation2 + $0x28] sm:$0xff]
    %v84 = vld [vmem:[#allocation2 + $0x30] sm:$0xff]
    %v85 = vld [vmem:[#allocation2 + $0x38] sm:$0xff]
    %v86 = vpack.c.bf16 %v78, %v78
    %v87 = vpack.c.bf16 %v79, %v79
    %v88 = vpack.c.bf16 %v80, %v80
    %v89 = vpack.c.bf16 %v81, %v81
    %v90 = vpack.c.bf16 %v82, %v82
    %v91 = vpack.c.bf16 %v83, %v83
    %v92 = vpack.c.bf16 %v84, %v84
    %v93 = vpack.c.bf16 %v85, %v85
    %v94 = vld [vmem:[#allocation5] sm:$0xf]
    %v95 = vld [vmem:[#allocation5 + $0x4] sm:$0xf]
    %v96 = vld [vmem:[#allocation5 + $0x8] sm:$0xf]
    %v97 = vld [vmem:[#allocation5 + $0xc] sm:$0xf]
    %v98 = vld [vmem:[#allocation5 + $0x10] sm:$0xf]
    %v99 = vld [vmem:[#allocation5 + $0x14] sm:$0xf]
    %v100 = vld [vmem:[#allocation5 + $0x18] sm:$0xf]
    %v101 = vld [vmem:[#allocation5 + $0x1c] sm:$0xf]
    %v102 = vld [vmem:[#allocation5 + $0x20] sm:$0xf]
    %v103 = vld [vmem:[#allocation5 + $0x24] sm:$0xf]
    %v104 = vld [vmem:[#allocation5 + $0x28] sm:$0xf]
    %v105 = vld [vmem:[#allocation5 + $0x2c] sm:$0xf]
    %v106 = vld [vmem:[#allocation5 + $0x30] sm:$0xf]
    %v107 = vld [vmem:[#allocation5 + $0x34] sm:$0xf]
    %v108 = vld [vmem:[#allocation5 + $0x38] sm:$0xf]
    %v109 = vld [vmem:[#allocation5 + $0x3c] sm:$0xf]
    %v110 = vld [vmem:[#allocation5 + $0x40] sm:$0xf]
    %v111 = vld [vmem:[#allocation5 + $0x44] sm:$0xf]
    %v112 = vld [vmem:[#allocation5 + $0x48] sm:$0xf]
    %v113 = vld [vmem:[#allocation5 + $0x4c] sm:$0xf]
    %v114 = vld [vmem:[#allocation5 + $0x50] sm:$0xf]
    %v115 = vld [vmem:[#allocation5 + $0x54] sm:$0xf]
    %v116 = vld [vmem:[#allocation5 + $0x58] sm:$0xf]
    %v117 = vld [vmem:[#allocation5 + $0x5c] sm:$0xf]
    %v118 = vld [vmem:[#allocation5 + $0x60] sm:$0xf]
    %v119 = vld [vmem:[#allocation5 + $0x64] sm:$0xf]
    %v120 = vld [vmem:[#allocation5 + $0x68] sm:$0xf]
    %v121 = vld [vmem:[#allocation5 + $0x6c] sm:$0xf]
    %v122 = vld [vmem:[#allocation5 + $0x70] sm:$0xf]
    %v123 = vld [vmem:[#allocation5 + $0x74] sm:$0xf]
    %v124 = vld [vmem:[#allocation5 + $0x78] sm:$0xf]
    %v125 = vld [vmem:[#allocation5 + $0x7c] sm:$0xf]
    %v126 = vld [vmem:[#allocation5 + $0x80] sm:$0xf]
    %v127 = vld [vmem:[#allocation5 + $0x84] sm:$0xf]
    %v128 = vld [vmem:[#allocation5 + $0x88] sm:$0xf]
    %v129 = vld [vmem:[#allocation5 + $0x8c] sm:$0xf]
    %v130 = vld [vmem:[#allocation5 + $0x90] sm:$0xf]
    %v131 = vld [vmem:[#allocation5 + $0x94] sm:$0xf]
    %v132 = vld [vmem:[#allocation5 + $0x98] sm:$0xf]
    %v133 = vld [vmem:[#allocation5 + $0x9c] sm:$0xf]
    %v134 = vld [vmem:[#allocation5 + $0xa0] sm:$0xf]
    %v135 = vld [vmem:[#allocation5 + $0xa4] sm:$0xf]
    %v136 = vld [vmem:[#allocation5 + $0xa8] sm:$0xf]
    %v137 = vld [vmem:[#allocation5 + $0xac] sm:$0xf]
    %v138 = vld [vmem:[#allocation5 + $0xb0] sm:$0xf]
    %v139 = vld [vmem:[#allocation5 + $0xb4] sm:$0xf]
    %v140 = vld [vmem:[#allocation5 + $0xb8] sm:$0xf]
    %v141 = vld [vmem:[#allocation5 + $0xbc] sm:$0xf]
    %v142 = vld [vmem:[#allocation5 + $0xc0] sm:$0xf]
    %v143 = vld [vmem:[#allocation5 + $0xc4] sm:$0xf]
    %v144 = vld [vmem:[#allocation5 + $0xc8] sm:$0xf]
    %v145 = vld [vmem:[#allocation5 + $0xcc] sm:$0xf]
    %v146 = vld [vmem:[#allocation5 + $0xd0] sm:$0xf]
    %v147 = vld [vmem:[#allocation5 + $0xd4] sm:$0xf]
    %v148 = vld [vmem:[#allocation5 + $0xd8] sm:$0xf]
    %v149 = vld [vmem:[#allocation5 + $0xdc] sm:$0xf]
    %v150 = vld [vmem:[#allocation5 + $0xe0] sm:$0xf]
    %v151 = vld [vmem:[#allocation5 + $0xe4] sm:$0xf]
    %v152 = vld [vmem:[#allocation5 + $0xe8] sm:$0xf]
    %v153 = vld [vmem:[#allocation5 + $0xec] sm:$0xf]
    %v154 = vld [vmem:[#allocation5 + $0xf0] sm:$0xf]
    %v155 = vld [vmem:[#allocation5 + $0xf4] sm:$0xf]
    %v156 = vld [vmem:[#allocation5 + $0xf8] sm:$0xf]
    %v157 = vld [vmem:[#allocation5 + $0xfc] sm:$0xf]
    %v158 = vld [vmem:[#allocation5 + $0x100] sm:$0xf]
    %v159 = vld [vmem:[#allocation5 + $0x104] sm:$0xf]
    %v160 = vld [vmem:[#allocation5 + $0x108] sm:$0xf]
    %v161 = vld [vmem:[#allocation5 + $0x10c] sm:$0xf]
    %v162 = vld [vmem:[#allocation5 + $0x110] sm:$0xf]
    %v163 = vld [vmem:[#allocation5 + $0x114] sm:$0xf]
    %v164 = vld [vmem:[#allocation5 + $0x118] sm:$0xf]
    %v165 = vld [vmem:[#allocation5 + $0x11c] sm:$0xf]
    %v166 = vld [vmem:[#allocation5 + $0x120] sm:$0xf]
    %v167 = vld [vmem:[#allocation5 + $0x124] sm:$0xf]
    %v168 = vld [vmem:[#allocation5 + $0x128] sm:$0xf]
    %v169 = vld [vmem:[#allocation5 + $0x12c] sm:$0xf]
    %v170 = vld [vmem:[#allocation5 + $0x130] sm:$0xf]
    %v171 = vld [vmem:[#allocation5 + $0x134] sm:$0xf]
    %v172 = vld [vmem:[#allocation5 + $0x138] sm:$0xf]
    %v173 = vld [vmem:[#allocation5 + $0x13c] sm:$0xf]
    %v174 = vld [vmem:[#allocation5 + $0x140] sm:$0xf]
    %v175 = vld [vmem:[#allocation5 + $0x144] sm:$0xf]
    %v176 = vld [vmem:[#allocation5 + $0x148] sm:$0xf]
    %v177 = vld [vmem:[#allocation5 + $0x14c] sm:$0xf]
    %v178 = vld [vmem:[#allocation5 + $0x150] sm:$0xf]
    %v179 = vld [vmem:[#allocation5 + $0x154] sm:$0xf]
    %v180 = vld [vmem:[#allocation5 + $0x158] sm:$0xf]
    %v181 = vld [vmem:[#allocation5 + $0x15c] sm:$0xf]
    %v182 = vld [vmem:[#allocation5 + $0x160] sm:$0xf]
    %v183 = vld [vmem:[#allocation5 + $0x164] sm:$0xf]
    %v184 = vld [vmem:[#allocation5 + $0x168] sm:$0xf]
    %v185 = vld [vmem:[#allocation5 + $0x16c] sm:$0xf]
    %v186 = vld [vmem:[#allocation5 + $0x170] sm:$0xf]
    %v187 = vld [vmem:[#allocation5 + $0x174] sm:$0xf]
    %v188 = vld [vmem:[#allocation5 + $0x178] sm:$0xf]
    %v189 = vld [vmem:[#allocation5 + $0x17c] sm:$0xf]
    %v190 = vld [vmem:[#allocation5 + $0x180] sm:$0xf]
    %v191 = vld [vmem:[#allocation5 + $0x184] sm:$0xf]
    %v192 = vld [vmem:[#allocation5 + $0x188] sm:$0xf]
    %v193 = vld [vmem:[#allocation5 + $0x18c] sm:$0xf]
    %v194 = vld [vmem:[#allocation5 + $0x190] sm:$0xf]
    %v195 = vld [vmem:[#allocation5 + $0x194] sm:$0xf]
    %v196 = vld [vmem:[#allocation5 + $0x198] sm:$0xf]
    %v197 = vld [vmem:[#allocation5 + $0x19c] sm:$0xf]
    %v198 = vld [vmem:[#allocation5 + $0x1a0] sm:$0xf]
    %v199 = vld [vmem:[#allocation5 + $0x1a4] sm:$0xf]
    %v200 = vld [vmem:[#allocation5 + $0x1a8] sm:$0xf]
    %v201 = vld [vmem:[#allocation5 + $0x1ac] sm:$0xf]
    %v202 = vld [vmem:[#allocation5 + $0x1b0] sm:$0xf]
    %v203 = vld [vmem:[#allocation5 + $0x1b4] sm:$0xf]
    %v204 = vld [vmem:[#allocation5 + $0x1b8] sm:$0xf]
    %v205 = vld [vmem:[#allocation5 + $0x1bc] sm:$0xf]
    %v206 = vld [vmem:[#allocation5 + $0x1c0] sm:$0xf]
    %v207 = vld [vmem:[#allocation5 + $0x1c4] sm:$0xf]
    %v208 = vld [vmem:[#allocation5 + $0x1c8] sm:$0xf]
    %v209 = vld [vmem:[#allocation5 + $0x1cc] sm:$0xf]
    %v210 = vld [vmem:[#allocation5 + $0x1d0] sm:$0xf]
    %v211 = vld [vmem:[#allocation5 + $0x1d4] sm:$0xf]
    %v212 = vld [vmem:[#allocation5 + $0x1d8] sm:$0xf]
    %v213 = vld [vmem:[#allocation5 + $0x1dc] sm:$0xf]
    %v214 = vld [vmem:[#allocation5 + $0x1e0] sm:$0xf]
    %v215 = vld [vmem:[#allocation5 + $0x1e4] sm:$0xf]
    %v216 = vld [vmem:[#allocation5 + $0x1e8] sm:$0xf]
    %v217 = vld [vmem:[#allocation5 + $0x1ec] sm:$0xf]
    %v218 = vld [vmem:[#allocation5 + $0x1f0] sm:$0xf]
    %v219 = vld [vmem:[#allocation5 + $0x1f4] sm:$0xf]
    %v220 = vld [vmem:[#allocation5 + $0x1f8] sm:$0xf]
    %v221 = vld [vmem:[#allocation5 + $0x1fc] sm:$0xf]
    %v222 = vld [vmem:[%s2] sm:$0x1]
    %v224 = vlaneseq
    %v225 = vshrl.u32 %v224, 7
    %v226 = vsub.s32 0, %v225
    %v227 = vrot.slane %v222, %v226
    %v357 = vunpack.c.l.b16 %v94
    %v358 = vunpack.c.l.b16 %v95
    %v359 = vunpack.c.l.b16 %v96
    %v360 = vunpack.c.l.b16 %v97
    %v361 = vunpack.c.l.b16 %v98
    %v362 = vunpack.c.l.b16 %v99
    %v363 = vunpack.c.l.b16 %v100
    %v364 = vunpack.c.l.b16 %v101
    %v365 = vunpack.c.l.b16 %v102
    %v366 = vunpack.c.l.b16 %v103
    %v367 = vunpack.c.l.b16 %v104
    %v368 = vunpack.c.l.b16 %v105
    %v369 = vunpack.c.l.b16 %v106
    %v370 = vunpack.c.l.b16 %v107
    %v371 = vunpack.c.l.b16 %v108
    %v372 = vunpack.c.l.b16 %v109
    %v373 = vunpack.c.l.b16 %v110
    %v374 = vunpack.c.l.b16 %v111
    %v375 = vunpack.c.l.b16 %v112
    %v376 = vunpack.c.l.b16 %v113
    %v377 = vunpack.c.l.b16 %v114
    %v378 = vunpack.c.l.b16 %v115
    %v379 = vunpack.c.l.b16 %v116
    %v380 = vunpack.c.l.b16 %v117
    %v381 = vunpack.c.l.b16 %v118
    %v382 = vunpack.c.l.b16 %v119
    %v383 = vunpack.c.l.b16 %v120
    %v384 = vunpack.c.l.b16 %v121
    %v385 = vunpack.c.l.b16 %v122
    %v386 = vunpack.c.l.b16 %v123
    %v387 = vunpack.c.l.b16 %v124
    %v388 = vunpack.c.l.b16 %v125
    %v389 = vunpack.c.l.b16 %v126
    %v390 = vunpack.c.l.b16 %v127
    %v391 = vunpack.c.l.b16 %v128
    %v392 = vunpack.c.l.b16 %v129
    %v393 = vunpack.c.l.b16 %v130
    %v394 = vunpack.c.l.b16 %v131
    %v395 = vunpack.c.l.b16 %v132
    %v396 = vunpack.c.l.b16 %v133
    %v397 = vunpack.c.l.b16 %v134
    %v398 = vunpack.c.l.b16 %v135
    %v399 = vunpack.c.l.b16 %v136
    %v400 = vunpack.c.l.b16 %v137
    %v401 = vunpack.c.l.b16 %v138
    %v402 = vunpack.c.l.b16 %v139
    %v403 = vunpack.c.l.b16 %v140
    %v404 = vunpack.c.l.b16 %v141
    %v405 = vunpack.c.l.b16 %v142
    %v406 = vunpack.c.l.b16 %v143
    %v407 = vunpack.c.l.b16 %v144
    %v408 = vunpack.c.l.b16 %v145
    %v409 = vunpack.c.l.b16 %v146
    %v410 = vunpack.c.l.b16 %v147
    %v411 = vunpack.c.l.b16 %v148
    %v412 = vunpack.c.l.b16 %v149
    %v413 = vunpack.c.l.b16 %v150
    %v414 = vunpack.c.l.b16 %v151
    %v415 = vunpack.c.l.b16 %v152
    %v416 = vunpack.c.l.b16 %v153
    %v417 = vunpack.c.l.b16 %v154
    %v418 = vunpack.c.l.b16 %v155
    %v419 = vunpack.c.l.b16 %v156
    %v420 = vunpack.c.l.b16 %v157
    %v421 = vunpack.c.l.b16 %v158
    %v422 = vunpack.c.l.b16 %v159
    %v423 = vunpack.c.l.b16 %v160
    %v424 = vunpack.c.l.b16 %v161
    %v425 = vunpack.c.l.b16 %v162
    %v426 = vunpack.c.l.b16 %v163
    %v427 = vunpack.c.l.b16 %v164
    %v428 = vunpack.c.l.b16 %v165
    %v429 = vunpack.c.l.b16 %v166
    %v430 = vunpack.c.l.b16 %v167
    %v431 = vunpack.c.l.b16 %v168
    %v432 = vunpack.c.l.b16 %v169
    %v433 = vunpack.c.l.b16 %v170
    %v434 = vunpack.c.l.b16 %v171
    %v435 = vunpack.c.l.b16 %v172
    %v436 = vunpack.c.l.b16 %v173
    %v437 = vunpack.c.l.b16 %v174
    %v438 = vunpack.c.l.b16 %v175
    %v439 = vunpack.c.l.b16 %v176
    %v440 = vunpack.c.l.b16 %v177
    %v441 = vunpack.c.l.b16 %v178
    %v442 = vunpack.c.l.b16 %v179
    %v443 = vunpack.c.l.b16 %v180
    %v444 = vunpack.c.l.b16 %v181
    %v445 = vunpack.c.l.b16 %v182
    %v446 = vunpack.c.l.b16 %v183
    %v447 = vunpack.c.l.b16 %v184
    %v448 = vunpack.c.l.b16 %v185
    %v449 = vunpack.c.l.b16 %v186
    %v450 = vunpack.c.l.b16 %v187
    %v451 = vunpack.c.l.b16 %v188
    %v452 = vunpack.c.l.b16 %v189
    %v453 = vunpack.c.l.b16 %v190
    %v454 = vunpack.c.l.b16 %v191
    %v455 = vunpack.c.l.b16 %v192
    %v456 = vunpack.c.l.b16 %v193
    %v457 = vunpack.c.l.b16 %v194
    %v458 = vunpack.c.l.b16 %v195
    %v459 = vunpack.c.l.b16 %v196
    %v460 = vunpack.c.l.b16 %v197
    %v461 = vunpack.c.l.b16 %v198
    %v462 = vunpack.c.l.b16 %v199
    %v463 = vunpack.c.l.b16 %v200
    %v464 = vunpack.c.l.b16 %v201
    %v465 = vunpack.c.l.b16 %v202
    %v466 = vunpack.c.l.b16 %v203
    %v467 = vunpack.c.l.b16 %v204
    %v468 = vunpack.c.l.b16 %v205
    %v469 = vunpack.c.l.b16 %v206
    %v470 = vunpack.c.l.b16 %v207
    %v471 = vunpack.c.l.b16 %v208
    %v472 = vunpack.c.l.b16 %v209
    %v473 = vunpack.c.l.b16 %v210
    %v474 = vunpack.c.l.b16 %v211
    %v475 = vunpack.c.l.b16 %v212
    %v476 = vunpack.c.l.b16 %v213
    %v477 = vunpack.c.l.b16 %v214
    %v478 = vunpack.c.l.b16 %v215
    %v479 = vunpack.c.l.b16 %v216
    %v480 = vunpack.c.l.b16 %v217
    %v481 = vunpack.c.l.b16 %v218
    %v482 = vunpack.c.l.b16 %v219
    %v483 = vunpack.c.l.b16 %v220
    %v484 = vunpack.c.l.b16 %v221
    %v485 = vpack.c.b16 %v358, %v357
    %v486 = vpack.c.b16 %v360, %v359
    %v487 = vpack.c.b16 %v362, %v361
    %v488 = vpack.c.b16 %v364, %v363
    %v489 = vpack.c.b16 %v366, %v365
    %v490 = vpack.c.b16 %v368, %v367
    %v491 = vpack.c.b16 %v370, %v369
    %v492 = vpack.c.b16 %v372, %v371
    %v493 = vpack.c.b16 %v374, %v373
    %v494 = vpack.c.b16 %v376, %v375
    %v495 = vpack.c.b16 %v378, %v377
    %v496 = vpack.c.b16 %v380, %v379
    %v497 = vpack.c.b16 %v382, %v381
    %v498 = vpack.c.b16 %v384, %v383
    %v499 = vpack.c.b16 %v386, %v385
    %v500 = vpack.c.b16 %v388, %v387
    %v501 = vpack.c.b16 %v390, %v389
    %v502 = vpack.c.b16 %v392, %v391
    %v503 = vpack.c.b16 %v394, %v393
    %v504 = vpack.c.b16 %v396, %v395
    %v505 = vpack.c.b16 %v398, %v397
    %v506 = vpack.c.b16 %v400, %v399
    %v507 = vpack.c.b16 %v402, %v401
    %v508 = vpack.c.b16 %v404, %v403
    %v509 = vpack.c.b16 %v406, %v405
    %v510 = vpack.c.b16 %v408, %v407
    %v511 = vpack.c.b16 %v410, %v409
    %v512 = vpack.c.b16 %v412, %v411
    %v513 = vpack.c.b16 %v414, %v413
    %v514 = vpack.c.b16 %v416, %v415
    %v515 = vpack.c.b16 %v418, %v417
    %v516 = vpack.c.b16 %v420, %v419
    %v517 = vpack.c.b16 %v422, %v421
    %v518 = vpack.c.b16 %v424, %v423
    %v519 = vpack.c.b16 %v426, %v425
    %v520 = vpack.c.b16 %v428, %v427
    %v521 = vpack.c.b16 %v430, %v429
    %v522 = vpack.c.b16 %v432, %v431
    %v523 = vpack.c.b16 %v434, %v433
    %v524 = vpack.c.b16 %v436, %v435
    %v525 = vpack.c.b16 %v438, %v437
    %v526 = vpack.c.b16 %v440, %v439
    %v527 = vpack.c.b16 %v442, %v441
    %v528 = vpack.c.b16 %v444, %v443
    %v529 = vpack.c.b16 %v446, %v445
    %v530 = vpack.c.b16 %v448, %v447
    %v531 = vpack.c.b16 %v450, %v449
    %v532 = vpack.c.b16 %v452, %v451
    %v533 = vpack.c.b16 %v454, %v453
    %v534 = vpack.c.b16 %v456, %v455
    %v535 = vpack.c.b16 %v458, %v457
    %v536 = vpack.c.b16 %v460, %v459
    %v537 = vpack.c.b16 %v462, %v461
    %v538 = vpack.c.b16 %v464, %v463
    %v539 = vpack.c.b16 %v466, %v465
    %v540 = vpack.c.b16 %v468, %v467
    %v541 = vpack.c.b16 %v470, %v469
    %v542 = vpack.c.b16 %v472, %v471
    %v543 = vpack.c.b16 %v474, %v473
    %v544 = vpack.c.b16 %v476, %v475
    %v545 = vpack.c.b16 %v478, %v477
    %v546 = vpack.c.b16 %v480, %v479
    %v547 = vpack.c.b16 %v482, %v481
    %v548 = vpack.c.b16 %v484, %v483
    %613 = vmatprep.subr.bf16.mxu0 0
    %614 = vmatpush1.bf16.msra.mxu0 %v485
    %615 = vmatprep.subr.bf16.mxu0 0
    %616 = vmatpush1.bf16.msra.mxu0 %v486
    %617 = vmatprep.subr.bf16.mxu0 0
    %618 = vmatpush1.bf16.msra.mxu0 %v487
    %619 = vmatprep.subr.bf16.mxu0 0
    %620 = vmatpush1.bf16.msra.mxu0 %v488
    %621 = vmatprep.subr.bf16.mxu0 0
    %622 = vmatpush1.bf16.msra.mxu0 %v489
    %623 = vmatprep.subr.bf16.mxu0 0
    %624 = vmatpush1.bf16.msra.mxu0 %v490
    %625 = vmatprep.subr.bf16.mxu0 0
    %626 = vmatpush1.bf16.msra.mxu0 %v491
    %627 = vmatprep.subr.bf16.mxu0 0
    %628 = vmatpush1.bf16.msra.mxu0 %v492
    %629 = vmatprep.subr.bf16.mxu0 0
    %630 = vmatpush1.bf16.msra.mxu0 %v493
    %631 = vmatprep.subr.bf16.mxu0 0
    %632 = vmatpush1.bf16.msra.mxu0 %v494
    %633 = vmatprep.subr.bf16.mxu0 0
    %634 = vmatpush1.bf16.msra.mxu0 %v495
    %635 = vmatprep.subr.bf16.mxu0 0
    %636 = vmatpush1.bf16.msra.mxu0 %v496
    %637 = vmatprep.subr.bf16.mxu0 0
    %638 = vmatpush1.bf16.msra.mxu0 %v497
    %639 = vmatprep.subr.bf16.mxu0 0
    %640 = vmatpush1.bf16.msra.mxu0 %v498
    %641 = vmatprep.subr.bf16.mxu0 0
    %642 = vmatpush1.bf16.msra.mxu0 %v499
    %643 = vmatprep.subr.bf16.mxu0 0
    %644 = vmatpush1.bf16.msra.mxu0 %v500
    %645 = vmatprep.mubr.bf16.mxu0 %v87
    %646 = vmatmul.mubr.bf16.gmra.mrb[0].mxu0 %v86
    %v647 = vpop.f32.mrb[0].mxu0
    %v648 = vadd.f32 %v227, %v647
    %v649 = vpop.f32.mrb[0].mxu0
    %v650 = vpop.f32.mrb[0].mxu0
    %v651 = vpop.f32.mrb[0].mxu0
    %652 = vdwg.mxu0
    %653 = vmatprep.subr.bf16.mxu0 0
    %654 = vmatpush1.bf16.msra.mxu0 %v501
    %655 = vmatprep.subr.bf16.mxu0 0
    %656 = vmatpush1.bf16.msra.mxu0 %v502
    %657 = vmatprep.subr.bf16.mxu0 0
    %658 = vmatpush1.bf16.msra.mxu0 %v503
    %659 = vmatprep.subr.bf16.mxu0 0
    %660 = vmatpush1.bf16.msra.mxu0 %v504
    %661 = vmatprep.subr.bf16.mxu0 0
    %662 = vmatpush1.bf16.msra.mxu0 %v505
    %663 = vmatprep.subr.bf16.mxu0 0
    %664 = vmatpush1.bf16.msra.mxu0 %v506
    %665 = vmatprep.subr.bf16.mxu0 0
    %666 = vmatpush1.bf16.msra.mxu0 %v507
    %667 = vmatprep.subr.bf16.mxu0 0
    %668 = vmatpush1.bf16.msra.mxu0 %v508
    %669 = vmatprep.subr.bf16.mxu0 0
    %670 = vmatpush1.bf16.msra.mxu0 %v509
    %671 = vmatprep.subr.bf16.mxu0 0
    %672 = vmatpush1.bf16.msra.mxu0 %v510
    %673 = vmatprep.subr.bf16.mxu0 0
    %674 = vmatpush1.bf16.msra.mxu0 %v511
    %675 = vmatprep.subr.bf16.mxu0 0
    %676 = vmatpush1.bf16.msra.mxu0 %v512
    %677 = vmatprep.subr.bf16.mxu0 0
    %678 = vmatpush1.bf16.msra.mxu0 %v513
    %679 = vmatprep.subr.bf16.mxu0 0
    %680 = vmatpush1.bf16.msra.mxu0 %v514
    %681 = vmatprep.subr.bf16.mxu0 0
    %682 = vmatpush1.bf16.msra.mxu0 %v515
    %683 = vmatprep.subr.bf16.mxu0 0
    %684 = vmatpush1.bf16.msra.mxu0 %v516
    %685 = vmatprep.mubr.bf16.mxu0 %v89
    %686 = vmatmul.mubr.bf16.gmra.mrb[0].mxu0 %v88
    %v687 = vpop.f32.mrb[0].mxu0
    %v688 = vadd.f32 %v648, %v687
    %v689 = vpop.f32.mrb[0].mxu0
    %v690 = vpop.f32.mrb[0].mxu0
    %v691 = vpop.f32.mrb[0].mxu0
    %692 = vdwg.mxu0
    %693 = vmatprep.subr.bf16.mxu0 0
    %694 = vmatpush1.bf16.msra.mxu0 %v517
    %695 = vmatprep.subr.bf16.mxu0 0
    %696 = vmatpush1.bf16.msra.mxu0 %v518
    %697 = vmatprep.subr.bf16.mxu0 0
    %698 = vmatpush1.bf16.msra.mxu0 %v519
    %699 = vmatprep.subr.bf16.mxu0 0
    %700 = vmatpush1.bf16.msra.mxu0 %v520
    %701 = vmatprep.subr.bf16.mxu0 0
    %702 = vmatpush1.bf16.msra.mxu0 %v521
    %703 = vmatprep.subr.bf16.mxu0 0
    %704 = vmatpush1.bf16.msra.mxu0 %v522
    %705 = vmatprep.subr.bf16.mxu0 0
    %706 = vmatpush1.bf16.msra.mxu0 %v523
    %707 = vmatprep.subr.bf16.mxu0 0
    %708 = vmatpush1.bf16.msra.mxu0 %v524
    %709 = vmatprep.subr.bf16.mxu0 0
    %710 = vmatpush1.bf16.msra.mxu0 %v525
    %711 = vmatprep.subr.bf16.mxu0 0
    %712 = vmatpush1.bf16.msra.mxu0 %v526
    %713 = vmatprep.subr.bf16.mxu0 0
    %714 = vmatpush1.bf16.msra.mxu0 %v527
    %715 = vmatprep.subr.bf16.mxu0 0
    %716 = vmatpush1.bf16.msra.mxu0 %v528
    %717 = vmatprep.subr.bf16.mxu0 0
    %718 = vmatpush1.bf16.msra.mxu0 %v529
    %719 = vmatprep.subr.bf16.mxu0 0
    %720 = vmatpush1.bf16.msra.mxu0 %v530
    %721 = vmatprep.subr.bf16.mxu0 0
    %722 = vmatpush1.bf16.msra.mxu0 %v531
    %723 = vmatprep.subr.bf16.mxu0 0
    %724 = vmatpush1.bf16.msra.mxu0 %v532
    %725 = vmatprep.mubr.bf16.mxu0 %v91
    %726 = vmatmul.mubr.bf16.gmra.mrb[0].mxu0 %v90
    %v727 = vpop.f32.mrb[0].mxu0
    %v728 = vadd.f32 %v688, %v727
    %v729 = vpop.f32.mrb[0].mxu0
    %v730 = vpop.f32.mrb[0].mxu0
    %v731 = vpop.f32.mrb[0].mxu0
    %732 = vdwg.mxu0
    %733 = vmatprep.subr.bf16.mxu0 0
    %734 = vmatpush1.bf16.msra.mxu0 %v533
    %735 = vmatprep.subr.bf16.mxu0 0
    %736 = vmatpush1.bf16.msra.mxu0 %v534
    %737 = vmatprep.subr.bf16.mxu0 0
    %738 = vmatpush1.bf16.msra.mxu0 %v535
    %739 = vmatprep.subr.bf16.mxu0 0
    %740 = vmatpush1.bf16.msra.mxu0 %v536
    %741 = vmatprep.subr.bf16.mxu0 0
    %742 = vmatpush1.bf16.msra.mxu0 %v537
    %743 = vmatprep.subr.bf16.mxu0 0
    %744 = vmatpush1.bf16.msra.mxu0 %v538
    %745 = vmatprep.subr.bf16.mxu0 0
    %746 = vmatpush1.bf16.msra.mxu0 %v539
    %747 = vmatprep.subr.bf16.mxu0 0
    %748 = vmatpush1.bf16.msra.mxu0 %v540
    %749 = vmatprep.subr.bf16.mxu0 0
    %750 = vmatpush1.bf16.msra.mxu0 %v541
    %751 = vmatprep.subr.bf16.mxu0 0
    %752 = vmatpush1.bf16.msra.mxu0 %v542
    %753 = vmatprep.subr.bf16.mxu0 0
    %754 = vmatpush1.bf16.msra.mxu0 %v543
    %755 = vmatprep.subr.bf16.mxu0 0
    %756 = vmatpush1.bf16.msra.mxu0 %v544
    %757 = vmatprep.subr.bf16.mxu0 0
    %758 = vmatpush1.bf16.msra.mxu0 %v545
    %759 = vmatprep.subr.bf16.mxu0 0
    %760 = vmatpush1.bf16.msra.mxu0 %v546
    %761 = vmatprep.subr.bf16.mxu0 0
    %762 = vmatpush1.bf16.msra.mxu0 %v547
    %763 = vmatprep.subr.bf16.mxu0 0
    %764 = vmatpush1.bf16.msra.mxu0 %v548
    %765 = vmatprep.mubr.bf16.mxu0 %v93
    %766 = vmatmul.mubr.bf16.gmra.mrb[0].mxu0 %v92
    %v767 = vpop.f32.mrb[0].mxu0
    %v768 = vadd.f32 %v728, %v767
    %v769 = vpop.f32.mrb[0].mxu0
    %v770 = vpop.f32.mrb[0].mxu0
    %v771 = vpop.f32.mrb[0].mxu0
    %772 = vdwg.mxu0
    %v773 = vmin.f32 %v768, 20.0
    %v774 = vmul.f32 %v773, 1.442695
    %v775 = vpow.pop %v774
    %v776 = vadd.f32 %v775, 1.0
    %v777 = vmul.f32 %v776, %v776
    %v778 = vsub.f32 %v777, 1.0
    %v779 = vmul.f32 %v768, %v778
    %v780 = vadd.f32 %v777, 1.0
    %v781 = vrcp.pop %v780
    %v782 = vmul.f32 %v779, %v781
    %v783 = vpack.c.bf16 %v782, %v782
    %v784 = vld [vmem:[#allocation7] sm:$0xf]
    %v785 = vld [vmem:[#allocation7 + $0x4] sm:$0xf]
    %v786 = vld [vmem:[#allocation7 + $0x8] sm:$0xf]
    %v787 = vld [vmem:[#allocation7 + $0xc] sm:$0xf]
    %v788 = vld [vmem:[#allocation7 + $0x10] sm:$0xf]
    %v789 = vld [vmem:[#allocation7 + $0x14] sm:$0xf]
    %v790 = vld [vmem:[#allocation7 + $0x18] sm:$0xf]
    %v791 = vld [vmem:[#allocation7 + $0x1c] sm:$0xf]
    %v792 = vld [vmem:[#allocation7 + $0x20] sm:$0xf]
    %v793 = vld [vmem:[#allocation7 + $0x24] sm:$0xf]
    %v794 = vld [vmem:[#allocation7 + $0x28] sm:$0xf]
    %v795 = vld [vmem:[#allocation7 + $0x2c] sm:$0xf]
    %v796 = vld [vmem:[#allocation7 + $0x30] sm:$0xf]
    %v797 = vld [vmem:[#allocation7 + $0x34] sm:$0xf]
    %v798 = vld [vmem:[#allocation7 + $0x38] sm:$0xf]
    %v799 = vld [vmem:[#allocation7 + $0x3c] sm:$0xf]
    %v800 = vld [vmem:[%s4] sm:$0x1]
    %v802 = vlaneseq
    %v803 = vshrl.u32 %v802, 7
    %v804 = vsub.s32 0, %v803
    %v805 = vrot.slane %v800, %v804
    %v823 = vunpack.c.l.b16 %v784
    %v824 = vunpack.c.l.b16 %v785
    %v825 = vunpack.c.l.b16 %v786
    %v826 = vunpack.c.l.b16 %v787
    %v827 = vunpack.c.l.b16 %v788
    %v828 = vunpack.c.l.b16 %v789
    %v829 = vunpack.c.l.b16 %v790
    %v830 = vunpack.c.l.b16 %v791
    %v831 = vunpack.c.l.b16 %v792
    %v832 = vunpack.c.l.b16 %v793
    %v833 = vunpack.c.l.b16 %v794
    %v834 = vunpack.c.l.b16 %v795
    %v835 = vunpack.c.l.b16 %v796
    %v836 = vunpack.c.l.b16 %v797
    %v837 = vunpack.c.l.b16 %v798
    %v838 = vunpack.c.l.b16 %v799
    %v839 = vpack.c.b16 %v824, %v823
    %v840 = vpack.c.b16 %v826, %v825
    %v841 = vpack.c.b16 %v828, %v827
    %v842 = vpack.c.b16 %v830, %v829
    %v843 = vpack.c.b16 %v832, %v831
    %v844 = vpack.c.b16 %v834, %v833
    %v845 = vpack.c.b16 %v836, %v835
    %v846 = vpack.c.b16 %v838, %v837
    %855 = vmatprep.subr.bf16.mxu0 0
    %856 = vmatpush1.bf16.msra.mxu0 %v839
    %857 = vmatprep.subr.bf16.mxu0 0
    %858 = vmatpush1.bf16.msra.mxu0 %v840
    %859 = vmatprep.subr.bf16.mxu0 0
    %860 = vmatpush1.bf16.msra.mxu0 %v841
    %861 = vmatprep.subr.bf16.mxu0 0
    %862 = vmatpush1.bf16.msra.mxu0 %v842
    %863 = vmatprep.subr.bf16.mxu0 0
    %864 = vmatpush1.bf16.msra.mxu0 %v843
    %865 = vmatprep.subr.bf16.mxu0 0
    %866 = vmatpush1.bf16.msra.mxu0 %v844
    %867 = vmatprep.subr.bf16.mxu0 0
    %868 = vmatpush1.bf16.msra.mxu0 %v845
    %869 = vmatprep.subr.bf16.mxu0 0
    %870 = vmatpush1.bf16.msra.mxu0 %v846
    %871 = vmatprep.subr.bf16.mxu0 0
    %872 = vmatpush1.bf16.msra.mxu0 0
    %873 = vmatprep.subr.bf16.mxu0 0
    %874 = vmatpush1.bf16.msra.mxu0 0
    %875 = vmatprep.subr.bf16.mxu0 0
    %876 = vmatpush1.bf16.msra.mxu0 0
    %877 = vmatprep.subr.bf16.mxu0 0
    %878 = vmatpush1.bf16.msra.mxu0 0
    %879 = vmatprep.subr.bf16.mxu0 0
    %880 = vmatpush1.bf16.msra.mxu0 0
    %881 = vmatprep.subr.bf16.mxu0 0
    %882 = vmatpush1.bf16.msra.mxu0 0
    %883 = vmatprep.subr.bf16.mxu0 0
    %884 = vmatpush1.bf16.msra.mxu0 0
    %885 = vmatprep.subr.bf16.mxu0 0
    %886 = vmatpush1.bf16.msra.mxu0 0
    %887 = vmatprep.mubr.bf16.mxu0 0
    %888 = vmatmul.mubr.bf16.gmra.mrb[0].mxu0 %v783
    %v889 = vpop.f32.mrb[0].mxu0
    %v890 = vadd.f32 %v805, %v889
    %v891 = vpop.f32.mrb[0].mxu0
    %v892 = vpop.f32.mrb[0].mxu0
    %v893 = vpop.f32.mrb[0].mxu0
    %894 = vdwg.mxu0
    %v895 = vmin.f32 %v890, 20.0
    %v896 = vmul.f32 %v895, 1.442695
    %v897 = vpow.pop %v896
    %v898 = vadd.f32 %v897, 1.0
    %v899 = vmul.f32 %v898, %v898
    %v900 = vsub.f32 %v899, 1.0
    %v901 = vmul.f32 %v890, %v900
    %v902 = vadd.f32 %v899, 1.0
    %v903 = vrcp.pop %v902
    %v904 = vmul.f32 %v901, %v903
    %v905 = vld [vmem:[#allocation8] sm:$0xff]
    %v906 = vld [vmem:[#allocation8 + $0x8] sm:$0xff]
    %v907 = vld [vmem:[#allocation8 + $0x10] sm:$0xff]
    %v908 = vld [vmem:[#allocation8 + $0x18] sm:$0xff]
    %v909 = vld [vmem:[#allocation8 + $0x20] sm:$0xff]
    %v910 = vld [vmem:[#allocation8 + $0x28] sm:$0xff]
    %v911 = vld [vmem:[#allocation8 + $0x30] sm:$0xff]
    %v912 = vld [vmem:[#allocation8 + $0x38] sm:$0xff]
    %v913 = vld [vmem:[#allocation8 + $0x40] sm:$0xff]
    %v914 = vld [vmem:[#allocation8 + $0x48] sm:$0xff]
    %v915 = vld [vmem:[#allocation8 + $0x50] sm:$0xff]
    %v916 = vld [vmem:[#allocation8 + $0x58] sm:$0xff]
    %v917 = vld [vmem:[#allocation8 + $0x60] sm:$0xff]
    %v918 = vld [vmem:[#allocation8 + $0x68] sm:$0xff]
    %v919 = vld [vmem:[#allocation8 + $0x70] sm:$0xff]
    %v920 = vld [vmem:[#allocation8 + $0x78] sm:$0xff]
    %921 = vmatprep.subr.mxu0 0.0
    %922 = vmatpush1.msra.mxu0 %v905
    %923 = vmatprep.subr.mxu0 0.0
    %924 = vmatpush1.msra.mxu0 %v906
    %925 = vmatprep.subr.mxu0 0.0
    %926 = vmatpush1.msra.mxu0 %v907
    %927 = vmatprep.subr.mxu0 0.0
    %928 = vmatpush1.msra.mxu0 %v908
    %929 = vmatprep.subr.mxu0 0.0
    %930 = vmatpush1.msra.mxu0 %v909
    %931 = vmatprep.subr.mxu0 0.0
    %932 = vmatpush1.msra.mxu0 %v910
    %933 = vmatprep.subr.mxu0 0.0
    %934 = vmatpush1.msra.mxu0 %v911
    %935 = vmatprep.subr.mxu0 0.0
    %936 = vmatpush1.msra.mxu0 %v912
    %937 = vmatprep.subr.mxu0 0.0
    %938 = vmatpush1.msra.mxu0 %v913
    %939 = vmatprep.subr.mxu0 0.0
    %940 = vmatpush1.msra.mxu0 %v914
    %941 = vmatprep.subr.mxu0 0.0
    %942 = vmatpush1.msra.mxu0 %v915
    %943 = vmatprep.subr.mxu0 0.0
    %944 = vmatpush1.msra.mxu0 %v916
    %945 = vmatprep.subr.mxu0 0.0
    %946 = vmatpush1.msra.mxu0 %v917
    %947 = vmatprep.subr.mxu0 0.0
    %948 = vmatpush1.msra.mxu0 %v918
    %949 = vmatprep.subr.mxu0 0.0
    %950 = vmatpush1.msra.mxu0 %v919
    %951 = vmatprep.subr.mxu0 0.0
    %952 = vmatpush1.msra.mxu0 %v920
    %953 = vmatprep.subr.mxu0 0.0
    %954 = vmatpush1.msra.mxu0 0.0
    %955 = vmatprep.subr.mxu0 0.0
    %956 = vmatpush1.msra.mxu0 0.0
    %957 = vmatprep.subr.mxu0 0.0
    %958 = vmatpush1.msra.mxu0 0.0
    %959 = vmatprep.subr.mxu0 0.0
    %960 = vmatpush1.msra.mxu0 0.0
    %961 = vmatprep.subr.mxu0 0.0
    %962 = vmatpush1.msra.mxu0 0.0
    %963 = vmatprep.subr.mxu0 0.0
    %964 = vmatpush1.msra.mxu0 0.0
    %965 = vmatprep.subr.mxu0 0.0
    %966 = vmatpush1.msra.mxu0 0.0
    %967 = vmatprep.subr.mxu0 0.0
    %968 = vmatpush1.msra.mxu0 0.0
    %969 = vmatprep.subr.mxu0 0.0
    %970 = vmatpush1.msra.mxu0 0.0
    %971 = vmatprep.subr.mxu0 0.0
    %972 = vmatpush1.msra.mxu0 0.0
    %973 = vmatprep.subr.mxu0 0.0
    %974 = vmatpush1.msra.mxu0 0.0
    %975 = vmatprep.subr.mxu0 0.0
    %976 = vmatpush1.msra.mxu0 0.0
    %977 = vmatprep.subr.mxu0 0.0
    %978 = vmatpush1.msra.mxu0 0.0
    %979 = vmatprep.subr.mxu0 0.0
    %980 = vmatpush1.msra.mxu0 0.0
    %981 = vmatprep.subr.mxu0 0.0
    %982 = vmatpush1.msra.mxu0 0.0
    %983 = vmatprep.subr.mxu0 0.0
    %984 = vmatpush1.msra.mxu0 0.0
    %985 = vmatprep.mubr.f32.mxu0 0.0
    %986 = vmatmul.mubr.f32.gmra.mrb[0].mxu0 %v904
    %v987 = vpop.f32.mrb[0].mxu0
    %v988 = vadd.f32 0.0, %v987
    %v989 = vpop.f32.mrb[0].mxu0
    %990 = vdwg.mxu0
    %v991 = vlaneseq
    %v992 = vand.u32 %v991, 127
    %vm993 = vcmp.ge.s32.totalorder %v992, 1
    %vm994 = vcmp.lt.s32.totalorder %v992, 5
    %vm995 = vmand %vm993, %vm994
    %vm996 = vcmp.ge.s32.totalorder %v992, 8
    %vm997 = vcmp.lt.s32.totalorder %v992, 12
    %vm998 = vmand %vm996, %vm997
    %v999 = vsel %vm995, %v988, -1e+30
    %1000 = vmax.xlane.f32.xlu0 %v999
    %v1001 = vpop.xlane.xlu0 %1000
    %v1002 = vsub.f32 %v999, %v1001
    %v1003 = vmul.f32 %v1002, 1.442695
    %v1004 = vpow.pop %v1003
    %1005 = vadd.xlane.f32.xlu0 %v1004
    %v1006 = vpop.xlane.xlu0 %1005
    %v1007 = vrcp.pop %v1006
    %v1008 = vlog2.pop %v1006
    %v1009 = vmul.f32 %v1008, 0.6931472
    %v1010 = vmul.f32 %v1004, %v1007
    %v1011 = vadd.f32 %v1001, %v1009
    %v1012 = vsub.f32 %v988, %v1011
    %v1013 = vsel %vm995, %v1012, 0.0
    %v1014 = vmul.f32 %v1010, %v1013
    %1015 = vadd.xlane.f32.xlu0 %v1014
    %v1016 = vpop.xlane.xlu0 %1015
    %v1017 = vsel %vm998, %v1012, %v988
    %vm1018 = vcmp.eq.s32.totalorder %v992, 16
    %v1019 = vsel %vm1018, %v1016, %v1017
    %1020 = vst [vmem:[#allocation10] sm:$0xff] %v1019
    // Predicated region
    $region42: #{tpu_custom_call.1} parent=1 // pred_check
      _
    $region43: #{tpu_custom_call.1} parent=1 // pred_check_branch
      %1022 = sbr.rel (0) target = $region45
    $region44: #{tpu_custom_call.1} parent=1 // pred_region
      %s1024 = ssub.s32 128, 128
      %1025 = vsyncadd [#allocation4], %s1024
      %s1027 = sshll.u32 [#allocation10], 4
      %s1028 = int_to_ptr.vmem [resolvable:$true] %s1027
      %1030 = dma.vmem_to_hbm [thread:$0]  %s1028, 128, %s6, [#allocation4]
    $region45: #{tpu_custom_call.1} parent=1 // pred_fallthru
      _
    // Predicated region
    $region46: #{tpu_custom_call.1} parent=1 // pred_check
      _
    $region47: #{tpu_custom_call.1} parent=1 // pred_check_branch
      %1032 = sbr.rel (0) target = $region49
    $region48: #{tpu_custom_call.1} parent=1 // pred_region
      %1033 = dma.done [#allocation4], 128
    $region49: #{tpu_custom_call.1} parent=1 // pred_fallthru
      _
    %1034 = vsyncpa [#allocation3], 1
    %1035 = vsyncpa [#allocation6], 1
    %1036 = vsyncpa [#allocation9], 1
    %1037 = vsyncpa [#allocation4], 1

</llo_original>
